<compile_context>
chip_gen: v6e
topology: v6e:2x2x1
jax: 0.10.0
libtpu: 0.0.40
codegen_flags: <defaults>
</compile_context>

<pallas_src>
import functools
import math

import jax
import jax.numpy as jnp
from jax.experimental import pallas as pl
from jax.experimental.pallas import tpu as pltpu


def _round_up(x: int, m: int) -> int:
    return ((x + m - 1) // m) * m


def _matching_kernel(emb_ref, w_ref, out_ref, acc_ref):
    i = pl.program_id(0)

    @pl.when(i == 0)
    def _():
        acc_ref[...] = jnp.zeros_like(acc_ref)

    # Streamed, lane-dense row-sum over this node tile (VPU adds only).
    acc_ref[...] += jnp.sum(emb_ref[...], axis=0, keepdims=True)

    @pl.when(i == pl.num_programs(0) - 1)
    def _():
        # One tiny matvec, once per kernel.  w_ref is the vertically tiled
        # weight (lanes, F3), so this dot also folds the `pack` lane groups.
        ctx = jnp.dot(acc_ref[...], w_ref[...],
                      preferred_element_type=jnp.float32)
        out_ref[...] = jnp.tanh(ctx).astype(out_ref.dtype)


def matching_module_forward(embedding: jax.Array,
                            weight_matrix: jax.Array,
                            *,
                            tile_rows: int = 512) -> jax.Array:
    """embedding: (N, F3) f32, weight_matrix: (F3, F3) f32 -> (F3,) f32."""
    n, f3 = embedding.shape
    assert weight_matrix.shape == (f3, f3)

    # Lane packing factor: present `pack` original rows per packed row so the
    # lane dimension fills 128 (F3 = 32 -> pack = 4 -> 128 lanes).
    pack = (128 // f3) if (f3 <= 128 and 128 % f3 == 0) else 1
    lanes = pack * f3

    # Pad N with zero rows (harmless for the sum) so the packed view tiles
    # evenly; tile row count is a multiple of 8 (sublane rule).
    r_needed = -(-n // pack)
    tr = min(tile_rows, _round_up(r_needed, 8))
    tr = _round_up(tr, 8)
    r_pad = _round_up(r_needed, tr)
    n_pad = r_pad * pack

    emb = embedding.astype(jnp.float32)
    if n_pad != n:
        emb = jnp.pad(emb, ((0, n_pad - n), (0, 0)))
    emb_packed = emb.reshape(r_pad, lanes)          # contiguous, zero-copy view

    # Vertically tiled weight: (lanes, F3).  acc (1, lanes) @ w_packed (lanes, F3)
    # == sum over lane groups of (group_sum @ W).
    w = weight_matrix.astype(jnp.float32)
    w_packed = jnp.tile(w, (pack, 1)) if pack > 1 else w

    grid = (r_pad // tr,)

    cost = pl.CostEstimate(
        flops=2 * n_pad * f3 + 2 * lanes * f3,
        transcendentals=f3,
        bytes_accessed=(n_pad * f3 + lanes * f3 + f3) * 4,
    )

    out = pl.pallas_call(
        functools.partial(_matching_kernel),
        out_shape=jax.ShapeDtypeStruct((1, f3), jnp.float32),
        grid=grid,
        in_specs=[
            pl.BlockSpec((tr, lanes), lambda i: (i, 0)),     # streamed node tiles
            pl.BlockSpec((lanes, f3), lambda i: (0, 0)),     # weight: resident
        ],
        out_specs=pl.BlockSpec((1, f3), lambda i: (0, 0)),
        scratch_shapes=[pltpu.VMEM((1, lanes), jnp.float32)],
        compiler_params=pltpu.CompilerParams(
            dimension_semantics=("arbitrary",),              # reduction axis
        ),
        cost_estimate=cost,
    )(emb_packed, w_packed)
    return out[0]  # (F3,)


def xavier_uniform(key, shape, dtype=jnp.float32):
    fan_in, fan_out = shape[0], shape[1]
    bound = math.sqrt(6.0 / (fan_in + fan_out))
    return jax.random.uniform(key, shape, dtype=dtype, minval=-bound, maxval=bound)


if __name__ == "__main__":
    # args.filters_3 -> F3; N nodes in the graph embedding.
    F3 = 32
    N = 8

    key = jax.random.PRNGKey(0)
    k_emb, k_w, k_big = jax.random.split(key, 3)

    embedding = jax.random.normal(k_emb, (N, F3), dtype=jnp.float32)
    weight_matrix = xavier_uniform(k_w, (F3, F3))

    out = matching_module_forward(embedding, weight_matrix)
    jax.block_until_ready(out)

    # Reference in plain JAX (same semantics as the PyTorch forward).
    ref = jnp.tanh(jnp.sum(embedding @ weight_matrix, axis=0))
    assert out.shape == (F3,)
    assert jnp.allclose(out, ref, atol=1e-5, rtol=1e-5)

    # Secondary check: exercises padding + multi-step streamed accumulation.
    N_big = 5000
    emb_big = jax.random.normal(k_big, (N_big, F3), dtype=jnp.float32)
    out_big = matching_module_forward(emb_big, weight_matrix)
    jax.block_until_ready(out_big)
    ref_big = jnp.tanh(jnp.sum(emb_big @ weight_matrix, axis=0))
    assert jnp.allclose(out_big, ref_big, atol=1e-4, rtol=1e-4)

    print("KERNEL_OK")
</pallas_src>

<mosaic_0001>
module attributes {stable_mosaic.version = 11 : i64} {
  func.func @_matching_kernel(%arg0: i32, %arg1: memref<8x128xf32, #tpu.memory_space<vmem>>, %arg2: memref<128x32xf32, #tpu.memory_space<vmem>>, %arg3: memref<1x32xf32, #tpu.memory_space<vmem>>, %arg4: memref<1x128xf32, #tpu.memory_space<vmem>>) attributes {dimension_semantics = [#tpu.dimension_semantics<arbitrary>], iteration_bounds = array<i64: 1>, scalar_prefetch = 0 : i64, scratch_operands = 1 : i64, tpu.core_type = #tpu.core_type<tc>, window_params = [{transform_indices = @transform_0, window_bounds = array<i64: 8, 128>}, {pipeline_mode = #tpu.pipeline_mode<synchronous>, transform_indices = @transform_1, window_bounds = array<i64: 128, 32>}, {pipeline_mode = #tpu.pipeline_mode<synchronous>, transform_indices = @transform_2, window_bounds = array<i64: 1, 32>}]} {
    %c0_i32 = arith.constant 0 : i32
    %0 = arith.cmpi eq, %arg0, %c0_i32 : i32
    %1 = arith.extui %0 : i1 to i32
    %c0_i32_0 = arith.constant 0 : i32
    %2 = arith.cmpi ne, %1, %c0_i32_0 : i32
    scf.if %2 {
      %cst_8 = arith.constant 0.000000e+00 : f32
      %12 = vector.broadcast %cst_8 : f32 to vector<1x128xf32>
      %c0_9 = arith.constant 0 : index
      %c0_10 = arith.constant 0 : index
      %13 = vector.load %arg4[%c0_9, %c0_10] : memref<1x128xf32, #tpu.memory_space<vmem>>, vector<1x128xf32>
      tpu.vector_store %arg4[%c0_9, %c0_10], %12 {strides = array<i32>} : memref<1x128xf32, #tpu.memory_space<vmem>>, vector<1x128xf32>,
    } else {
    }
    %c0 = arith.constant 0 : index
    %c0_1 = arith.constant 0 : index
    %3 = vector.load %arg4[%c0, %c0_1] : memref<1x128xf32, #tpu.memory_space<vmem>>, vector<1x128xf32>
    %c0_2 = arith.constant 0 : index
    %c0_3 = arith.constant 0 : index
    %4 = vector.load %arg1[%c0_2, %c0_3] : memref<8x128xf32, #tpu.memory_space<vmem>>, vector<8x128xf32>
    %cst = arith.constant dense<0.000000e+00> : vector<128xf32>
    %5 = vector.multi_reduction <add>, %4, %cst [0] : vector<8x128xf32> to vector<128xf32>
    %6 = vector.shape_cast %5 : vector<128xf32> to vector<1x128xf32>
    %7 = arith.addf %3, %6 : vector<1x128xf32>
    %c0_4 = arith.constant 0 : index
    %c0_5 = arith.constant 0 : index
    %8 = vector.load %arg4[%c0_4, %c0_5] : memref<1x128xf32, #tpu.memory_space<vmem>>, vector<1x128xf32>
    tpu.vector_store %arg4[%c0_4, %c0_5], %7 {strides = array<i32>} : memref<1x128xf32, #tpu.memory_space<vmem>>, vector<1x128xf32>,
    %c0_i32_6 = arith.constant 0 : i32
    %9 = arith.cmpi eq, %arg0, %c0_i32_6 : i32
    %10 = arith.extui %9 : i1 to i32
    %c0_i32_7 = arith.constant 0 : i32
    %11 = arith.cmpi ne, %10, %c0_i32_7 : i32
    scf.if %11 {
      %c0_8 = arith.constant 0 : index
      %c0_9 = arith.constant 0 : index
      %12 = vector.load %arg4[%c0_8, %c0_9] : memref<1x128xf32, #tpu.memory_space<vmem>>, vector<1x128xf32>
      %c0_10 = arith.constant 0 : index
      %c0_11 = arith.constant 0 : index
      %13 = vector.load %arg2[%c0_10, %c0_11] : memref<128x32xf32, #tpu.memory_space<vmem>>, vector<128x32xf32>
      %cst_12 = arith.constant dense<0.000000e+00> : vector<1x32xf32>
      %14 = tpu.matmul %12, %13, %cst_12 {dimension_numbers = #tpu.dot_dimension_numbers<[1], [0], [0], [1], [0, 0, 1, 1], [], []>} : vector<1x128xf32>, vector<128x32xf32>, vector<1x32xf32> -> vector<1x32xf32>
      %15 = math.tanh %14 : vector<1x32xf32>
      %c0_13 = arith.constant 0 : index
      %c0_14 = arith.constant 0 : index
      %16 = vector.load %arg3[%c0_13, %c0_14] : memref<1x32xf32, #tpu.memory_space<vmem>>, vector<1x32xf32>
      tpu.vector_store %arg3[%c0_13, %c0_14], %15 {strides = array<i32>} : memref<1x32xf32, #tpu.memory_space<vmem>>, vector<1x32xf32>,
    } else {
    }
    return
  }
  func.func @transform_0(%arg0: i32) -> (i32, i32) {
    %c0_i32 = arith.constant 0 : i32
    %c0_i32_0 = arith.constant 0 : i32
    return %arg0, %c0_i32 : i32, i32
  }
  func.func @transform_1(%arg0: i32) -> (i32, i32) {
    %c0_i32 = arith.constant 0 : i32
    %c0_i32_0 = arith.constant 0 : i32
    %c0_i32_1 = arith.constant 0 : i32
    return %c0_i32, %c0_i32_0 : i32, i32
  }
  func.func @transform_2(%arg0: i32) -> (i32, i32) {
    %c0_i32 = arith.constant 0 : i32
    %c0_i32_0 = arith.constant 0 : i32
    %c0_i32_1 = arith.constant 0 : i32
    return %c0_i32, %c0_i32_0 : i32, i32
  }
}

</mosaic_0001>

<llo_original>
// kernel: tpu_custom_call.1
$region0: #{tpu_custom_call.1}
  #allocation0 [shape = 'u32[]', space=smem, size = 0x4, offset = 0x4, fixed_abs, tag = 'smem constant byte address 0x4 - core index']
  #allocation1 [shape = 'u32[144,128]{1,0:T(1,128)}', space=vmem, size = 0x12000, scoped, tag = 'internal scratch']
  #allocation2 [shape = 'f32[1,128]{1,0:T(1,128)}', space=vmem, size = 0x200, scoped, tag = 'scratch operand']
  %s0 = inlined_call_operand.vmem [shape: f32[8,128], index: 0, kind: input, shape index: {}]
  %s1 = inlined_call_operand.vmem [shape: f32[128,32], index: 1, kind: input, shape index: {}]
  %s2 = inlined_call_operand.hbm [shape: f32[1,32], index: 2, kind: output, shape index: {}]
  %s3 = sld [smem:[#allocation0]]
  $region26: #{tpu_custom_call.1} parent=0
    _
  %s5 = ssub.s32 1, %s3
  %s6 = scalar_select 0, %s5, %s3
  $region1: #{tpu_custom_call.1} parent=0
    #allocation3 [shape = 'u8[512]{0}', space=vmem, size = 0x400, scoped, tag = 'output window, operand 0, single buffered']
    #allocation4 [shape = 's32[1]{0}', space=sflag, size = 0x4, scoped, tag = 'scoped memory for tpu_custom_call.1']
    %7 = vsyncpa [#allocation4], 0
    // Predicated region
    $region2: #{tpu_custom_call.1} parent=1 // pred_check
      _
    $region3: #{tpu_custom_call.1} parent=1 // pred_check_branch
      %9 = sbr.rel (0) target = $region5
    $region4: #{tpu_custom_call.1} parent=1 // pred_region
      _
    $region5: #{tpu_custom_call.1} parent=1 // pred_fallthru
      _
    // Predicated region
    $region6: #{tpu_custom_call.1} parent=1 // pred_check
      _
    $region7: #{tpu_custom_call.1} parent=1 // pred_check_branch
      %11 = sbr.rel (0) target = $region9
    $region8: #{tpu_custom_call.1} parent=1 // pred_region
      _
    $region9: #{tpu_custom_call.1} parent=1 // pred_fallthru
      _
    %p12 = scmp.eq.s32.totalorder 0, 0
    // Predicated region
    $region10: #{tpu_custom_call.1} parent=1 // pred_check
      %p13 = pneg %p12
    $region11: #{tpu_custom_call.1} parent=1 // pred_check_branch
      %15 = sbr.rel (%p13) target = $region13
    $region12: #{tpu_custom_call.1} parent=1 // pred_region
      %16 = vst [vmem:[#allocation2] sm:$0x1] 0.0
    $region13: #{tpu_custom_call.1} parent=1 // pred_fallthru
      _
    %v17 = vld [vmem:[#allocation2] sm:$0x1]
    %v18 = vld [vmem:[%s0] sm:$0xff]
    %v19 = vrot.slane %v18, 4
    %v20 = vadd.f32 %v18, %v19
    %v21 = vrot.slane %v20, 2
    %v22 = vadd.f32 %v20, %v21
    %v23 = vrot.slane %v22, 1
    %v24 = vadd.f32 %v22, %v23
    %v25 = vadd.f32 %v17, %v24
    %26 = vst [vmem:[#allocation2] sm:$0x1] %v25
    // Predicated region
    $region14: #{tpu_custom_call.1} parent=1 // pred_check
      %p27 = pneg %p12
    $region15: #{tpu_custom_call.1} parent=1 // pred_check_branch
      %29 = sbr.rel (%p27) target = $region17
    $region16: #{tpu_custom_call.1} parent=1 // pred_region
      %v30 = vld [vmem:[#allocation2] sm:$0x1]
      %v31 = vld [vmem:[%s1] sm:$0xff]
      %v32 = vld [vmem:[%s1 + $0x8] sm:$0xff]
      %v33 = vld [vmem:[%s1 + $0x10] sm:$0xff]
      %v34 = vld [vmem:[%s1 + $0x18] sm:$0xff]
      %v35 = vld [vmem:[%s1 + $0x20] sm:$0xff]
      %v36 = vld [vmem:[%s1 + $0x28] sm:$0xff]
      %v37 = vld [vmem:[%s1 + $0x30] sm:$0xff]
      %v38 = vld [vmem:[%s1 + $0x38] sm:$0xff]
      %v39 = vld [vmem:[%s1 + $0x40] sm:$0xff]
      %v40 = vld [vmem:[%s1 + $0x48] sm:$0xff]
      %v41 = vld [vmem:[%s1 + $0x50] sm:$0xff]
      %v42 = vld [vmem:[%s1 + $0x58] sm:$0xff]
      %v43 = vld [vmem:[%s1 + $0x60] sm:$0xff]
      %v44 = vld [vmem:[%s1 + $0x68] sm:$0xff]
      %v45 = vld [vmem:[%s1 + $0x70] sm:$0xff]
      %v46 = vld [vmem:[%s1 + $0x78] sm:$0xff]
      %47 = vmatprep.subr.mxu0 0.0
      %48 = vmatpush1.msra.mxu0 %v46
      %49 = vmatprep.subr.mxu0 0.0
      %50 = vmatpush1.msra.mxu0 %v45
      %51 = vmatprep.subr.mxu0 0.0
      %52 = vmatpush1.msra.mxu0 %v44
      %53 = vmatprep.subr.mxu0 0.0
      %54 = vmatpush1.msra.mxu0 %v43
      %55 = vmatprep.subr.mxu0 0.0
      %56 = vmatpush1.msra.mxu0 %v42
      %57 = vmatprep.subr.mxu0 0.0
      %58 = vmatpush1.msra.mxu0 %v41
      %59 = vmatprep.subr.mxu0 0.0
      %60 = vmatpush1.msra.mxu0 %v40
      %61 = vmatprep.subr.mxu0 0.0
      %62 = vmatpush1.msra.mxu0 %v39
      %63 = vmatprep.subr.mxu0 0.0
      %64 = vmatpush1.msra.mxu0 %v38
      %65 = vmatprep.subr.mxu0 0.0
      %66 = vmatpush1.msra.mxu0 %v37
      %67 = vmatprep.subr.mxu0 0.0
      %68 = vmatpush1.msra.mxu0 %v36
      %69 = vmatprep.subr.mxu0 0.0
      %70 = vmatpush1.msra.mxu0 %v35
      %71 = vmatprep.subr.mxu0 0.0
      %72 = vmatpush1.msra.mxu0 %v34
      %73 = vmatprep.subr.mxu0 0.0
      %74 = vmatpush1.msra.mxu0 %v33
      %75 = vmatprep.subr.mxu0 0.0
      %76 = vmatpush1.msra.mxu0 %v32
      %77 = vmatprep.subr.mxu0 0.0
      %78 = vmatpush1.msra.mxu0 %v31
      %79 = vmatprep.subr.mxu0 0.0
      %80 = vmatpush2.msra.mxu0 0.0
      %81 = vmatprep.subr.mxu0 0.0
      %82 = vmatpush2.msra.mxu0 0.0
      %83 = vmatprep.subr.mxu0 0.0
      %84 = vmatpush2.msra.mxu0 0.0
      %85 = vmatprep.subr.mxu0 0.0
      %86 = vmatpush2.msra.mxu0 0.0
      %87 = vmatprep.subr.mxu0 0.0
      %88 = vmatpush2.msra.mxu0 0.0
      %89 = vmatprep.subr.mxu0 0.0
      %90 = vmatpush2.msra.mxu0 0.0
      %91 = vmatprep.subr.mxu0 0.0
      %92 = vmatpush2.msra.mxu0 0.0
      %93 = vmatprep.subr.mxu0 0.0
      %94 = vmatpush2.msra.mxu0 0.0
      %95 = vmatprep.subr.mxu0 0.0
      %96 = vmatpush2.msra.mxu0 0.0
      %97 = vmatprep.subr.mxu0 0.0
      %98 = vmatpush2.msra.mxu0 0.0
      %99 = vmatprep.subr.mxu0 0.0
      %100 = vmatpush2.msra.mxu0 0.0
      %101 = vmatprep.subr.mxu0 0.0
      %102 = vmatpush2.msra.mxu0 0.0
      %103 = vmatprep.subr.mxu0 0.0
      %104 = vmatpush2.msra.mxu0 0.0
      %105 = vmatprep.subr.mxu0 0.0
      %106 = vmatpush2.msra.mxu0 0.0
      %107 = vmatprep.subr.mxu0 0.0
      %108 = vmatpush2.msra.mxu0 0.0
      %109 = vmatprep.subr.mxu0 0.0
      %110 = vmatpush2.msra.mxu0 0.0
      %111 = vmatprep.mubr.f32.mxu0 0.0
      %112 = vmatmul.mubr.f32.gmra.mxu0 %v30
      %v113 = vpop.f32.mrf.mxu0
      %v114 = vadd.f32 0.0, %v113
      %v115 = vpop.f32.mrf.mxu0
      %116 = vdwg.mxu0
      %v117 = vtanh.pop %v114
      %vm118 = vcmask 253952
      %119 = vst.msk [vmem:[#allocation3] sm:$0x1] %vm118, %v117
    $region17: #{tpu_custom_call.1} parent=1 // pred_fallthru
      _
    // Predicated region
    $region18: #{tpu_custom_call.1} parent=1 // pred_check
      _
    $region19: #{tpu_custom_call.1} parent=1 // pred_check_branch
      %121 = sbr.rel (0) target = $region21
    $region20: #{tpu_custom_call.1} parent=1 // pred_region
      %s123 = ssub.s32 16, 16
      %124 = vsyncadd [#allocation4], %s123
      %s126 = sshll.u32 [#allocation3], 4
      %s127 = int_to_ptr.vmem [resolvable:$true] %s126
      %129 = dma.vmem_to_hbm [thread:$0]  %s127, 16, %s2, [#allocation4]
    $region21: #{tpu_custom_call.1} parent=1 // pred_fallthru
      _
    // Predicated region
    $region22: #{tpu_custom_call.1} parent=1 // pred_check
      _
    $region23: #{tpu_custom_call.1} parent=1 // pred_check_branch
      %131 = sbr.rel (0) target = $region25
    $region24: #{tpu_custom_call.1} parent=1 // pred_region
      %132 = dma.done [#allocation4], 16
    $region25: #{tpu_custom_call.1} parent=1 // pred_fallthru
      _
    %133 = vsyncpa [#allocation4], 1

</llo_original>
